<compile_context>
chip_gen: v7x
topology: tpu7x:2x2x1
jax: 0.10.0
libtpu: 0.0.40
codegen_flags: <defaults>
</compile_context>

<pallas_src>
import jax
import jax.numpy as jnp
from jax.experimental import pallas as pl
from jax.experimental.pallas import tpu as pltpu

HIDDEN = 64        # torch mean_net hidden width
HID_PAD = 128      # lane-dense padded hidden width
ROW_ALIGN = 16     # bf16 sublane packing granularity
OUT_ALIGN = 8      # f32 sublane granularity for the narrow output slab


def _round_up(x, m):
    return (x + m - 1) // m * m


def _vmem_limit_bytes():
    """Generation-dependent scoped-VMEM limit: 32 MiB on v7x, 64 MiB on v5e/v6e."""
    try:
        cap = pltpu.get_tpu_info().vmem_capacity_bytes
    except Exception:
        cap = 64 * 1024 * 1024
    return max(32 * 1024 * 1024, min(cap // 2, 64 * 1024 * 1024))


def _actor_kernel(obs_ref, w1_ref, b1_ref, w2_ref, b2_ref, w3_ref, b3_ref,
                  mean_ref):
    # Layer 1: Linear(ob_dim -> hidden) + Tanh.  bf16 operands into the MXU,
    # f32 accumulation; bias add + tanh in f32 (v5e has no bf16 VPU/EUP).
    h1 = jnp.tanh(
        jnp.dot(obs_ref[...], w1_ref[...], preferred_element_type=jnp.float32)
        + b1_ref[...])
    # Layer 2: Linear(hidden -> hidden) + Tanh
    h2 = jnp.tanh(
        jnp.dot(h1.astype(jnp.bfloat16), w2_ref[...],
                preferred_element_type=jnp.float32)
        + b2_ref[...])
    # Layer 3: Linear(hidden -> ac_dim_padded), Identity output activation
    mean = (jnp.dot(h2.astype(jnp.bfloat16), w3_ref[...],
                    preferred_element_type=jnp.float32)
            + b3_ref[...])
    mean_ref[...] = mean.astype(mean_ref.dtype)


def prepare_params(params):
    """One-time parameter prep (do at init / after each optimizer step).

    Pads hidden 64 -> 128 (lane-dense, MXU columns fully used) and ac_dim ->
    round_up(ac_dim, 8) (narrow output slab -> minimal writeback), and casts
    matmul operands to bf16.  Zero pad rows/cols keep the math exact
    (tanh(0)=0 in padded lanes; zero rows contribute nothing).
    """
    w1, b1 = params["w1"], params["b1"]
    w2, b2 = params["w2"], params["b2"]
    w3, b3 = params["w3"], params["b3"]
    ob_dim = w1.shape[0]
    ac_dim = w3.shape[1]
    acp = _round_up(ac_dim, OUT_ALIGN)

    w1p = (jnp.zeros((ob_dim, HID_PAD), jnp.float32)
           .at[:, :HIDDEN].set(w1)).astype(jnp.bfloat16)
    b1p = jnp.zeros((1, HID_PAD), jnp.float32).at[0, :HIDDEN].set(b1)
    w2p = (jnp.zeros((HID_PAD, HID_PAD), jnp.float32)
           .at[:HIDDEN, :HIDDEN].set(w2)).astype(jnp.bfloat16)
    b2p = jnp.zeros((1, HID_PAD), jnp.float32).at[0, :HIDDEN].set(b2)
    w3p = (jnp.zeros((HID_PAD, acp), jnp.float32)
           .at[:HIDDEN, :ac_dim].set(w3)).astype(jnp.bfloat16)
    b3p = jnp.zeros((1, acp), jnp.float32).at[0, :ac_dim].set(b3)

    prepped = dict(params)  # keep f32 originals for the small-batch XLA path
    prepped.update(w1p=w1p, b1p=b1p, w2p=w2p, b2p=b2p, w3p=w3p, b3p=b3p,
                   ac_dim=ac_dim, acp=acp, ob_dim=ob_dim)
    return prepped


def _xla_forward(obs, p):
    """Plain-XLA path for tiny action-selection batches (kernel cost dominates)."""
    h1 = jnp.tanh(obs @ p["w1"] + p["b1"])
    h2 = jnp.tanh(h1 @ p["w2"] + p["b2"])
    mean = h2 @ p["w3"] + p["b3"]
    return mean, jnp.exp(p["logstd"])


def mlp_actor_forward(obs, prepped, *, n_tiles_target=2, max_tile_rows=8192,
                      min_pallas_batch=128, force_pallas=False):
    """Returns (batch_mean, scale) of the Normal action distribution."""
    if "w1p" not in prepped:          # accept raw params too (prep lazily)
        prepped = prepare_params(prepped)

    B, ob_dim = obs.shape
    ac_dim, acp = prepped["ac_dim"], prepped["acp"]
    assert ob_dim == prepped["ob_dim"]

    # Tiny-batch action selection: Pallas fixed cost dominates -> plain XLA.
    if B <= min_pallas_batch and not force_pallas:
        return _xla_forward(obs.astype(jnp.float32), prepped)

    # Tile selection: target n_tiles_target tiles (>=2 when B is large so both
    # v7x TensorCores work), each a multiple of 16 rows (bf16 sublane packing),
    # capped so the tile's VMEM footprint stays inside the scoped budget.
    tile_b = _round_up(pl.cdiv(B, n_tiles_target), ROW_ALIGN)
    tile_b = max(ROW_ALIGN, min(tile_b, _round_up(max_tile_rows, ROW_ALIGN)))
    b_pad = _round_up(B, tile_b)
    grid = (b_pad // tile_b,)

    # Only re-materialize obs when padding is actually needed.
    # TODO(synk): handle the ragged last tile with an in-kernel row mask
    # instead of padding, to avoid the extra copy for non-aligned B.
    obs_bf16 = obs.astype(jnp.bfloat16)
    if b_pad == B:
        obs_in = obs_bf16
    else:
        obs_in = (jnp.zeros((b_pad, ob_dim), jnp.bfloat16).at[:B].set(obs_bf16))

    w1p, b1p = prepped["w1p"], prepped["b1p"]
    w2p, b2p = prepped["w2p"], prepped["b2p"]
    w3p, b3p = prepped["w3p"], prepped["b3p"]

    flops = 2 * b_pad * (ob_dim * HID_PAD + HID_PAD * HID_PAD + HID_PAD * acp)
    transcendentals = 2 * b_pad * HID_PAD
    bytes_accessed = (b_pad * ob_dim * 2 + b_pad * acp * 4
                      + (w1p.size + w2p.size + w3p.size) * 2
                      + (b1p.size + b2p.size + b3p.size) * 4)

    mean_p = pl.pallas_call(
        _actor_kernel,
        out_shape=jax.ShapeDtypeStruct((b_pad, acp), jnp.float32),
        grid_spec=pltpu.PrefetchScalarGridSpec(
            num_scalar_prefetch=0,
            grid=grid,
            in_specs=[
                pl.BlockSpec((tile_b, ob_dim), lambda i: (i, 0)),    # obs tile
                pl.BlockSpec((ob_dim, HID_PAD), lambda i: (0, 0)),   # w1 (resident)
                pl.BlockSpec((1, HID_PAD), lambda i: (0, 0)),        # b1
                pl.BlockSpec((HID_PAD, HID_PAD), lambda i: (0, 0)),  # w2
                pl.BlockSpec((1, HID_PAD), lambda i: (0, 0)),        # b2
                pl.BlockSpec((HID_PAD, acp), lambda i: (0, 0)),      # w3
                pl.BlockSpec((1, acp), lambda i: (0, 0)),            # b3
            ],
            out_specs=pl.BlockSpec((tile_b, acp), lambda i: (i, 0)),
        ),
        compiler_params=pltpu.CompilerParams(
            dimension_semantics=("parallel",),     # v7x: batch tiles across 2 TCs
            vmem_limit_bytes=_vmem_limit_bytes(),  # 32 MiB v7x, 64 MiB v5e/v6e
        ),
        cost_estimate=pl.CostEstimate(
            flops=flops,
            transcendentals=transcendentals,
            bytes_accessed=bytes_accessed,
        ),
    )(obs_in, w1p, b1p, w2p, b2p, w3p, b3p)

    mean = mean_p[:B, :ac_dim]
    # scale = exp(logstd): batch-independent glue, kept outside the kernel.
    scale = jnp.exp(prepped["logstd"])
    return mean, scale


def init_params(key, ob_dim, ac_dim, hidden=HIDDEN):
    """Deterministic init mimicking torch.nn.Linear default (U[-1/sqrt(fan_in), ...])."""
    def linear(k, fan_in, fan_out):
        kw, kb = jax.random.split(k)
        bound = 1.0 / jnp.sqrt(fan_in)
        w = jax.random.uniform(kw, (fan_in, fan_out), jnp.float32, -bound, bound)
        b = jax.random.uniform(kb, (fan_out,), jnp.float32, -bound, bound)
        return w, b

    k1, k2, k3 = jax.random.split(key, 3)
    w1, b1 = linear(k1, ob_dim, hidden)
    w2, b2 = linear(k2, hidden, hidden)
    w3, b3 = linear(k3, hidden, ac_dim)
    # log_std = -0.5 * np.ones(ac_dim)  (nn.Parameter in the torch module)
    logstd = jnp.full((ac_dim,), -0.5, dtype=jnp.float32)
    return dict(w1=w1, b1=b1, w2=w2, b2=b2, w3=w3, b3=b3, logstd=logstd)


def reference_forward(obs, p):
    h1 = jnp.tanh(obs @ p["w1"] + p["b1"])
    h2 = jnp.tanh(h1 @ p["w2"] + p["b2"])
    mean = h2 @ p["w3"] + p["b3"]
    scale = jnp.exp(p["logstd"])
    return mean, scale


if __name__ == "__main__":
    key = jax.random.PRNGKey(0)
    k_params, k_obs1, k_obs2 = jax.random.split(key, 3)

    ob_dim, ac_dim = 16, 4
    params = init_params(k_params, ob_dim, ac_dim, hidden=HIDDEN)
    prepped = prepare_params(params)   # one-time weight prep (hoisted out of forward)

    # Small action-selection batch: force the Pallas path so the kernel runs.
    obs_small = jax.random.normal(k_obs1, (8, ob_dim), dtype=jnp.float32)
    mean_s, scale_s = mlp_actor_forward(obs_small, prepped, force_pallas=True)

    # Larger, non-tile-aligned batch: default dispatch -> 2-tile Pallas grid.
    obs_big = jax.random.normal(k_obs2, (520, ob_dim), dtype=jnp.float32)
    mean_b, scale_b = mlp_actor_forward(obs_big, prepped)

    jax.block_until_ready((mean_s, scale_s, mean_b, scale_b))

    ref_mean_s, ref_scale_s = reference_forward(obs_small, params)
    ref_mean_b, ref_scale_b = reference_forward(obs_big, params)

    assert mean_s.shape == (8, ac_dim) and mean_b.shape == (520, ac_dim)
    assert scale_s.shape == (ac_dim,) and scale_b.shape == (ac_dim,)
    # bf16 MXU operands with f32 accumulation vs the fp32 reference.
    assert jnp.allclose(mean_s, ref_mean_s, atol=2e-2, rtol=0.0)
    assert jnp.allclose(mean_b, ref_mean_b, atol=2e-2, rtol=0.0)
    assert jnp.allclose(scale_s, ref_scale_s, atol=1e-6, rtol=1e-6)
    assert jnp.allclose(scale_b, ref_scale_b, atol=1e-6, rtol=1e-6)

    # TODO(synk): Normal.sample() / log_prob are distribution glue, not kernel compute.
    print("KERNEL_OK")
</pallas_src>

<mosaic_0001>
module attributes {stable_mosaic.version = 11 : i64} {
  func.func @_actor_kernel(%arg0: i32, %arg1: memref<16x16xbf16, #tpu.memory_space<vmem>>, %arg2: memref<16x128xbf16, #tpu.memory_space<vmem>>, %arg3: memref<1x128xf32, #tpu.memory_space<vmem>>, %arg4: memref<128x128xbf16, #tpu.memory_space<vmem>>, %arg5: memref<1x128xf32, #tpu.memory_space<vmem>>, %arg6: memref<128x8xbf16, #tpu.memory_space<vmem>>, %arg7: memref<1x8xf32, #tpu.memory_space<vmem>>, %arg8: memref<16x8xf32, #tpu.memory_space<vmem>>) attributes {dimension_semantics = [#tpu.dimension_semantics<parallel>], iteration_bounds = array<i64: 1>, scalar_prefetch = 0 : i64, scratch_operands = 0 : i64, tpu.core_type = #tpu.core_type<tc>, window_params = [{transform_indices = @transform_0, window_bounds = array<i64: 16, 16>}, {pipeline_mode = #tpu.pipeline_mode<synchronous>, transform_indices = @transform_1, window_bounds = array<i64: 16, 128>}, {pipeline_mode = #tpu.pipeline_mode<synchronous>, transform_indices = @transform_2, window_bounds = array<i64: 1, 128>}, {pipeline_mode = #tpu.pipeline_mode<synchronous>, transform_indices = @transform_3, window_bounds = array<i64: 128, 128>}, {pipeline_mode = #tpu.pipeline_mode<synchronous>, transform_indices = @transform_4, window_bounds = array<i64: 1, 128>}, {pipeline_mode = #tpu.pipeline_mode<synchronous>, transform_indices = @transform_5, window_bounds = array<i64: 128, 8>}, {pipeline_mode = #tpu.pipeline_mode<synchronous>, transform_indices = @transform_6, window_bounds = array<i64: 1, 8>}, {transform_indices = @transform_7, window_bounds = array<i64: 16, 8>}]} {
    %c0 = arith.constant 0 : index
    %c0_0 = arith.constant 0 : index
    %0 = vector.load %arg1[%c0, %c0_0] : memref<16x16xbf16, #tpu.memory_space<vmem>>, vector<16x16xbf16>
    %c0_1 = arith.constant 0 : index
    %c0_2 = arith.constant 0 : index
    %1 = vector.load %arg2[%c0_1, %c0_2] : memref<16x128xbf16, #tpu.memory_space<vmem>>, vector<16x128xbf16>
    %cst = arith.constant dense<0.000000e+00> : vector<16x128xf32>
    %2 = tpu.matmul %0, %1, %cst {dimension_numbers = #tpu.dot_dimension_numbers<[1], [0], [0], [1], [0, 0, 1, 1], [], []>} : vector<16x16xbf16>, vector<16x128xbf16>, vector<16x128xf32> -> vector<16x128xf32>
    %c0_3 = arith.constant 0 : index
    %c0_4 = arith.constant 0 : index
    %3 = vector.load %arg3[%c0_3, %c0_4] : memref<1x128xf32, #tpu.memory_space<vmem>>, vector<1x128xf32>
    %4 = vector.broadcast %3 : vector<1x128xf32> to vector<16x128xf32>
    %5 = arith.addf %2, %4 : vector<16x128xf32>
    %6 = math.tanh %5 : vector<16x128xf32>
    %7 = arith.truncf %6 : vector<16x128xf32> to vector<16x128xbf16>
    %c0_5 = arith.constant 0 : index
    %c0_6 = arith.constant 0 : index
    %8 = vector.load %arg4[%c0_5, %c0_6] : memref<128x128xbf16, #tpu.memory_space<vmem>>, vector<128x128xbf16>
    %cst_7 = arith.constant dense<0.000000e+00> : vector<16x128xf32>
    %9 = tpu.matmul %7, %8, %cst_7 {dimension_numbers = #tpu.dot_dimension_numbers<[1], [0], [0], [1], [0, 0, 1, 1], [], []>} : vector<16x128xbf16>, vector<128x128xbf16>, vector<16x128xf32> -> vector<16x128xf32>
    %c0_8 = arith.constant 0 : index
    %c0_9 = arith.constant 0 : index
    %10 = vector.load %arg5[%c0_8, %c0_9] : memref<1x128xf32, #tpu.memory_space<vmem>>, vector<1x128xf32>
    %11 = vector.broadcast %10 : vector<1x128xf32> to vector<16x128xf32>
    %12 = arith.addf %9, %11 : vector<16x128xf32>
    %13 = math.tanh %12 : vector<16x128xf32>
    %14 = arith.truncf %13 : vector<16x128xf32> to vector<16x128xbf16>
    %c0_10 = arith.constant 0 : index
    %c0_11 = arith.constant 0 : index
    %15 = vector.load %arg6[%c0_10, %c0_11] : memref<128x8xbf16, #tpu.memory_space<vmem>>, vector<128x8xbf16>
    %cst_12 = arith.constant dense<0.000000e+00> : vector<16x8xf32>
    %16 = tpu.matmul %14, %15, %cst_12 {dimension_numbers = #tpu.dot_dimension_numbers<[1], [0], [0], [1], [0, 0, 1, 1], [], []>} : vector<16x128xbf16>, vector<128x8xbf16>, vector<16x8xf32> -> vector<16x8xf32>
    %c0_13 = arith.constant 0 : index
    %c0_14 = arith.constant 0 : index
    %17 = vector.load %arg7[%c0_13, %c0_14] : memref<1x8xf32, #tpu.memory_space<vmem>>, vector<1x8xf32>
    %18 = vector.broadcast %17 : vector<1x8xf32> to vector<16x8xf32>
    %19 = arith.addf %16, %18 : vector<16x8xf32>
    %c0_15 = arith.constant 0 : index
    %c0_16 = arith.constant 0 : index
    %20 = vector.load %arg8[%c0_15, %c0_16] : memref<16x8xf32, #tpu.memory_space<vmem>>, vector<16x8xf32>
    tpu.vector_store %arg8[%c0_15, %c0_16], %19 {strides = array<i32>} : memref<16x8xf32, #tpu.memory_space<vmem>>, vector<16x8xf32>,
    return
  }
  func.func @transform_0(%arg0: i32) -> (i32, i32) {
    %c0_i32 = arith.constant 0 : i32
    %c0_i32_0 = arith.constant 0 : i32
    return %arg0, %c0_i32 : i32, i32
  }
  func.func @transform_1(%arg0: i32) -> (i32, i32) {
    %c0_i32 = arith.constant 0 : i32
    %c0_i32_0 = arith.constant 0 : i32
    %c0_i32_1 = arith.constant 0 : i32
    return %c0_i32, %c0_i32_0 : i32, i32
  }
  func.func @transform_2(%arg0: i32) -> (i32, i32) {
    %c0_i32 = arith.constant 0 : i32
    %c0_i32_0 = arith.constant 0 : i32
    %c0_i32_1 = arith.constant 0 : i32
    return %c0_i32, %c0_i32_0 : i32, i32
  }
  func.func @transform_3(%arg0: i32) -> (i32, i32) {
    %c0_i32 = arith.constant 0 : i32
    %c0_i32_0 = arith.constant 0 : i32
    %c0_i32_1 = arith.constant 0 : i32
    return %c0_i32, %c0_i32_0 : i32, i32
  }
  func.func @transform_4(%arg0: i32) -> (i32, i32) {
    %c0_i32 = arith.constant 0 : i32
    %c0_i32_0 = arith.constant 0 : i32
    %c0_i32_1 = arith.constant 0 : i32
    return %c0_i32, %c0_i32_0 : i32, i32
  }
  func.func @transform_5(%arg0: i32) -> (i32, i32) {
    %c0_i32 = arith.constant 0 : i32
    %c0_i32_0 = arith.constant 0 : i32
    %c0_i32_1 = arith.constant 0 : i32
    return %c0_i32, %c0_i32_0 : i32, i32
  }
  func.func @transform_6(%arg0: i32) -> (i32, i32) {
    %c0_i32 = arith.constant 0 : i32
    %c0_i32_0 = arith.constant 0 : i32
    %c0_i32_1 = arith.constant 0 : i32
    return %c0_i32, %c0_i32_0 : i32, i32
  }
  func.func @transform_7(%arg0: i32) -> (i32, i32) {
    %c0_i32 = arith.constant 0 : i32
    %c0_i32_0 = arith.constant 0 : i32
    return %arg0, %c0_i32 : i32, i32
  }
}

</mosaic_0001>

<llo_original>
// kernel: tpu_custom_call.1
$region0: #{tpu_custom_call.1}
  #allocation0 [shape = 'u32[]', space=smem, size = 0x4, offset = 0x4, fixed_abs, tag = 'smem constant byte address 0x4 - core index']
  #allocation1 [shape = 'u32[144,128]{1,0:T(1,128)}', space=vmem, size = 0x12000, scoped, tag = 'internal scratch']
  %s0 = inlined_call_operand.vmem [shape: bf16[16,16], index: 0, kind: input, shape index: {}]
  %s1 = inlined_call_operand.hbm [shape: bf16[16,128], index: 1, kind: input, shape index: {}]
  %s2 = inlined_call_operand.vmem [shape: f32[1,128], index: 2, kind: input, shape index: {}]
  %s3 = inlined_call_operand.vmem [shape: bf16[128,128], index: 3, kind: input, shape index: {}]
  %s4 = inlined_call_operand.vmem [shape: f32[1,128], index: 4, kind: input, shape index: {}]
  %s5 = inlined_call_operand.vmem [shape: bf16[128,8], index: 5, kind: input, shape index: {}]
  %s6 = inlined_call_operand.vmem [shape: f32[1,8], index: 6, kind: input, shape index: {}]
  %s7 = inlined_call_operand.vmem [shape: f32[16,8], index: 7, kind: output, shape index: {}]
  %s8 = sld [smem:[#allocation0]]
  $region42: #{tpu_custom_call.1} parent=0
    _
  %s10 = ssub.s32 1, %s8
  %s11 = scalar_select 0, %s10, %s8
  $region1: #{tpu_custom_call.1} parent=0
    #allocation2 [shape = 'u8[4096]{0}', space=vmem, size = 0x1000, scoped, tag = 'input window, operand 1, single buffered']
    #allocation3 [shape = 's32[1]{0}', space=sflag, size = 0x4, scoped, tag = 'scoped memory for tpu_custom_call.1']
    %12 = vsyncpa [#allocation3], 0
    // Predicated region
    $region2: #{tpu_custom_call.1} parent=1 // pred_check
      _
    $region3: #{tpu_custom_call.1} parent=1 // pred_check_branch
      %14 = sbr.rel (0) target = $region5
    $region4: #{tpu_custom_call.1} parent=1 // pred_region
      _
    $region5: #{tpu_custom_call.1} parent=1 // pred_fallthru
      _
    // Predicated region
    $region6: #{tpu_custom_call.1} parent=1 // pred_check
      _
    $region7: #{tpu_custom_call.1} parent=1 // pred_check_branch
      %16 = sbr.rel (0) target = $region9
    $region8: #{tpu_custom_call.1} parent=1 // pred_region
      %s18 = ssub.s32 128, 128
      %19 = vsyncadd [#allocation3], %s18
      %s20 = sshll.u32 [#allocation2], 4
      %s21 = int_to_ptr.vmem [resolvable:$true] %s20
      %26 = dma.hbm_to_vmem [thread:$0]  %s1, 128, %s21, [#allocation3], 64, 64, 4
    $region9: #{tpu_custom_call.1} parent=1 // pred_fallthru
      _
    // Predicated region
    $region10: #{tpu_custom_call.1} parent=1 // pred_check
      _
    $region11: #{tpu_custom_call.1} parent=1 // pred_check_branch
      %28 = sbr.rel (0) target = $region13
    $region12: #{tpu_custom_call.1} parent=1 // pred_region
      _
    $region13: #{tpu_custom_call.1} parent=1 // pred_fallthru
      _
    // Predicated region
    $region14: #{tpu_custom_call.1} parent=1 // pred_check
      _
    $region15: #{tpu_custom_call.1} parent=1 // pred_check_branch
      %30 = sbr.rel (0) target = $region17
    $region16: #{tpu_custom_call.1} parent=1 // pred_region
      _
    $region17: #{tpu_custom_call.1} parent=1 // pred_fallthru
      _
    // Predicated region
    $region18: #{tpu_custom_call.1} parent=1 // pred_check
      _
    $region19: #{tpu_custom_call.1} parent=1 // pred_check_branch
      %32 = sbr.rel (0) target = $region21
    $region20: #{tpu_custom_call.1} parent=1 // pred_region
      _
    $region21: #{tpu_custom_call.1} parent=1 // pred_fallthru
      _
    // Predicated region
    $region22: #{tpu_custom_call.1} parent=1 // pred_check
      _
    $region23: #{tpu_custom_call.1} parent=1 // pred_check_branch
      %34 = sbr.rel (0) target = $region25
    $region24: #{tpu_custom_call.1} parent=1 // pred_region
      _
    $region25: #{tpu_custom_call.1} parent=1 // pred_fallthru
      _
    // Predicated region
    $region26: #{tpu_custom_call.1} parent=1 // pred_check
      _
    $region27: #{tpu_custom_call.1} parent=1 // pred_check_branch
      %36 = sbr.rel (0) target = $region29
    $region28: #{tpu_custom_call.1} parent=1 // pred_region
      _
    $region29: #{tpu_custom_call.1} parent=1 // pred_fallthru
      _
    // Predicated region
    $region30: #{tpu_custom_call.1} parent=1 // pred_check
      _
    $region31: #{tpu_custom_call.1} parent=1 // pred_check_branch
      %38 = sbr.rel (0) target = $region33
    $region32: #{tpu_custom_call.1} parent=1 // pred_region
      %39 = dma.done [#allocation3], 128
    $region33: #{tpu_custom_call.1} parent=1 // pred_fallthru
      _
    %v41 = vld [vmem:[%s0] sm:$0xf]
    %v42 = vld [vmem:[%s0 + $0x4] sm:$0xf]
    %v43 = vld [vmem:[#allocation2] sm:$0xf]
    %v44 = vld [vmem:[#allocation2 + $0x4] sm:$0xf]
    %v45 = vld [vmem:[%s2] sm:$0x1]
    %v47 = vlaneseq
    %v48 = vshrl.u32 %v47, 7
    %v49 = vsub.s32 0, %v48
    %v50 = vrot.slane %v45, %v49
    %v54 = vunpack.c.l.b16 %v41
    %v55 = vunpack.c.l.b16 %v42
    %v56 = vpack.c.b16 %v55, %v54
    %v59 = vunpack.c.l.b16 %v43
    %v60 = vunpack.c.l.b16 %v44
    %v61 = vpack.c.b16 %v60, %v59
    %vm63 = vcmask 130048
    %v65 = vsel %vm63, %v56, 0
    %67 = vmatprep.subr.bf16.mxu0 0
    %68 = vmatpush1.bf16.msra.mxu0 %v61
    %69 = vmatprep.subr.bf16.mxu0 0
    %70 = vmatpush1.bf16.msra.mxu0 0
    %71 = vmatprep.subr.bf16.mxu0 0
    %72 = vmatpush1.bf16.msra.mxu0 0
    %73 = vmatprep.subr.bf16.mxu0 0
    %74 = vmatpush1.bf16.msra.mxu0 0
    %75 = vmatprep.subr.bf16.mxu0 0
    %76 = vmatpush1.bf16.msra.mxu0 0
    %77 = vmatprep.subr.bf16.mxu0 0
    %78 = vmatpush1.bf16.msra.mxu0 0
    %79 = vmatprep.subr.bf16.mxu0 0
    %80 = vmatpush1.bf16.msra.mxu0 0
    %81 = vmatprep.subr.bf16.mxu0 0
    %82 = vmatpush1.bf16.msra.mxu0 0
    %83 = vmatprep.subr.bf16.mxu0 0
    %84 = vmatpush1.bf16.msra.mxu0 0
    %85 = vmatprep.subr.bf16.mxu0 0
    %86 = vmatpush1.bf16.msra.mxu0 0
    %87 = vmatprep.subr.bf16.mxu0 0
    %88 = vmatpush1.bf16.msra.mxu0 0
    %89 = vmatprep.subr.bf16.mxu0 0
    %90 = vmatpush1.bf16.msra.mxu0 0
    %91 = vmatprep.subr.bf16.mxu0 0
    %92 = vmatpush1.bf16.msra.mxu0 0
    %93 = vmatprep.subr.bf16.mxu0 0
    %94 = vmatpush1.bf16.msra.mxu0 0
    %95 = vmatprep.subr.bf16.mxu0 0
    %96 = vmatpush1.bf16.msra.mxu0 0
    %97 = vmatprep.subr.bf16.mxu0 0
    %98 = vmatpush1.bf16.msra.mxu0 0
    %99 = vmatprep.mubr.bf16.mxu0 0
    %100 = vmatmul.mubr.bf16.gmra.mrb[0].mxu0 %v65
    %v101 = vpop.f32.mrb[0].mxu0
    %v102 = vadd.f32 %v50, %v101
    %v103 = vpop.f32.mrb[0].mxu0
    %v104 = vpop.f32.mrb[0].mxu0
    %v105 = vadd.f32 %v50, %v104
    %v106 = vpop.f32.mrb[0].mxu0
    %107 = vdwg.mxu0
    %v108 = vtanh.pop %v102
    %v109 = vtanh.pop %v105
    %v110 = vpack.c.bf16 %v109, %v108
    %v111 = vld [vmem:[%s3] sm:$0xf]
    %v112 = vld [vmem:[%s3 + $0x4] sm:$0xf]
    %v113 = vld [vmem:[%s3 + $0x8] sm:$0xf]
    %v114 = vld [vmem:[%s3 + $0xc] sm:$0xf]
    %v115 = vld [vmem:[%s3 + $0x10] sm:$0xf]
    %v116 = vld [vmem:[%s3 + $0x14] sm:$0xf]
    %v117 = vld [vmem:[%s3 + $0x18] sm:$0xf]
    %v118 = vld [vmem:[%s3 + $0x1c] sm:$0xf]
    %v119 = vld [vmem:[%s3 + $0x20] sm:$0xf]
    %v120 = vld [vmem:[%s3 + $0x24] sm:$0xf]
    %v121 = vld [vmem:[%s3 + $0x28] sm:$0xf]
    %v122 = vld [vmem:[%s3 + $0x2c] sm:$0xf]
    %v123 = vld [vmem:[%s3 + $0x30] sm:$0xf]
    %v124 = vld [vmem:[%s3 + $0x34] sm:$0xf]
    %v125 = vld [vmem:[%s3 + $0x38] sm:$0xf]
    %v126 = vld [vmem:[%s3 + $0x3c] sm:$0xf]
    %v127 = vld [vmem:[%s4] sm:$0x1]
    %v129 = vlaneseq
    %v130 = vshrl.u32 %v129, 7
    %v131 = vsub.s32 0, %v130
    %v132 = vrot.slane %v127, %v131
    %v150 = vunpack.c.l.b16 %v111
    %v151 = vunpack.c.l.b16 %v112
    %v152 = vunpack.c.l.b16 %v113
    %v153 = vunpack.c.l.b16 %v114
    %v154 = vunpack.c.l.b16 %v115
    %v155 = vunpack.c.l.b16 %v116
    %v156 = vunpack.c.l.b16 %v117
    %v157 = vunpack.c.l.b16 %v118
    %v158 = vunpack.c.l.b16 %v119
    %v159 = vunpack.c.l.b16 %v120
    %v160 = vunpack.c.l.b16 %v121
    %v161 = vunpack.c.l.b16 %v122
    %v162 = vunpack.c.l.b16 %v123
    %v163 = vunpack.c.l.b16 %v124
    %v164 = vunpack.c.l.b16 %v125
    %v165 = vunpack.c.l.b16 %v126
    %v166 = vpack.c.b16 %v151, %v150
    %v167 = vpack.c.b16 %v153, %v152
    %v168 = vpack.c.b16 %v155, %v154
    %v169 = vpack.c.b16 %v157, %v156
    %v170 = vpack.c.b16 %v159, %v158
    %v171 = vpack.c.b16 %v161, %v160
    %v172 = vpack.c.b16 %v163, %v162
    %v173 = vpack.c.b16 %v165, %v164
    %182 = vmatprep.subr.bf16.mxu0 0
    %183 = vmatpush1.bf16.msra.mxu0 %v166
    %184 = vmatprep.subr.bf16.mxu0 0
    %185 = vmatpush1.bf16.msra.mxu0 %v167
    %186 = vmatprep.subr.bf16.mxu0 0
    %187 = vmatpush1.bf16.msra.mxu0 %v168
    %188 = vmatprep.subr.bf16.mxu0 0
    %189 = vmatpush1.bf16.msra.mxu0 %v169
    %190 = vmatprep.subr.bf16.mxu0 0
    %191 = vmatpush1.bf16.msra.mxu0 %v170
    %192 = vmatprep.subr.bf16.mxu0 0
    %193 = vmatpush1.bf16.msra.mxu0 %v171
    %194 = vmatprep.subr.bf16.mxu0 0
    %195 = vmatpush1.bf16.msra.mxu0 %v172
    %196 = vmatprep.subr.bf16.mxu0 0
    %197 = vmatpush1.bf16.msra.mxu0 %v173
    %198 = vmatprep.subr.bf16.mxu0 0
    %199 = vmatpush1.bf16.msra.mxu0 0
    %200 = vmatprep.subr.bf16.mxu0 0
    %201 = vmatpush1.bf16.msra.mxu0 0
    %202 = vmatprep.subr.bf16.mxu0 0
    %203 = vmatpush1.bf16.msra.mxu0 0
    %204 = vmatprep.subr.bf16.mxu0 0
    %205 = vmatpush1.bf16.msra.mxu0 0
    %206 = vmatprep.subr.bf16.mxu0 0
    %207 = vmatpush1.bf16.msra.mxu0 0
    %208 = vmatprep.subr.bf16.mxu0 0
    %209 = vmatpush1.bf16.msra.mxu0 0
    %210 = vmatprep.subr.bf16.mxu0 0
    %211 = vmatpush1.bf16.msra.mxu0 0
    %212 = vmatprep.subr.bf16.mxu0 0
    %213 = vmatpush1.bf16.msra.mxu0 0
    %214 = vmatprep.mubr.bf16.mxu0 0
    %215 = vmatmul.mubr.bf16.gmra.mrb[0].mxu0 %v110
    %v216 = vpop.f32.mrb[0].mxu0
    %v217 = vadd.f32 %v132, %v216
    %v218 = vpop.f32.mrb[0].mxu0
    %v219 = vpop.f32.mrb[0].mxu0
    %v220 = vadd.f32 %v132, %v219
    %v221 = vpop.f32.mrb[0].mxu0
    %222 = vdwg.mxu0
    %v223 = vtanh.pop %v217
    %v224 = vtanh.pop %v220
    %v225 = vpack.c.bf16 %v224, %v223
    %v226 = vld [vmem:[%s5] sm:$0xf]
    %v227 = vld [vmem:[%s5 + $0x4] sm:$0xf]
    %v228 = vld [vmem:[%s5 + $0x8] sm:$0xf]
    %v229 = vld [vmem:[%s5 + $0xc] sm:$0xf]
    %v230 = vld [vmem:[%s5 + $0x10] sm:$0xf]
    %v231 = vld [vmem:[%s5 + $0x14] sm:$0xf]
    %v232 = vld [vmem:[%s5 + $0x18] sm:$0xf]
    %v233 = vld [vmem:[%s5 + $0x1c] sm:$0xf]
    %v234 = vld [vmem:[%s5 + $0x20] sm:$0xf]
    %v235 = vld [vmem:[%s5 + $0x24] sm:$0xf]
    %v236 = vld [vmem:[%s5 + $0x28] sm:$0xf]
    %v237 = vld [vmem:[%s5 + $0x2c] sm:$0xf]
    %v238 = vld [vmem:[%s5 + $0x30] sm:$0xf]
    %v239 = vld [vmem:[%s5 + $0x34] sm:$0xf]
    %v240 = vld [vmem:[%s5 + $0x38] sm:$0xf]
    %v241 = vld [vmem:[%s5 + $0x3c] sm:$0xf]
    %v242 = vld [vmem:[%s6] sm:$0x1]
    %v244 = vlaneseq
    %v245 = vshrl.u32 %v244, 7
    %v246 = vsub.s32 0, %v245
    %v247 = vrot.slane %v242, %v246
    %v265 = vunpack.c.l.b16 %v226
    %v266 = vunpack.c.l.b16 %v227
    %v267 = vunpack.c.l.b16 %v228
    %v268 = vunpack.c.l.b16 %v229
    %v269 = vunpack.c.l.b16 %v230
    %v270 = vunpack.c.l.b16 %v231
    %v271 = vunpack.c.l.b16 %v232
    %v272 = vunpack.c.l.b16 %v233
    %v273 = vunpack.c.l.b16 %v234
    %v274 = vunpack.c.l.b16 %v235
    %v275 = vunpack.c.l.b16 %v236
    %v276 = vunpack.c.l.b16 %v237
    %v277 = vunpack.c.l.b16 %v238
    %v278 = vunpack.c.l.b16 %v239
    %v279 = vunpack.c.l.b16 %v240
    %v280 = vunpack.c.l.b16 %v241
    %v281 = vpack.c.b16 %v266, %v265
    %v282 = vpack.c.b16 %v268, %v267
    %v283 = vpack.c.b16 %v270, %v269
    %v284 = vpack.c.b16 %v272, %v271
    %v285 = vpack.c.b16 %v274, %v273
    %v286 = vpack.c.b16 %v276, %v275
    %v287 = vpack.c.b16 %v278, %v277
    %v288 = vpack.c.b16 %v280, %v279
    %297 = vmatprep.subr.bf16.mxu0 0
    %298 = vmatpush1.bf16.msra.mxu0 %v281
    %299 = vmatprep.subr.bf16.mxu0 0
    %300 = vmatpush1.bf16.msra.mxu0 %v282
    %301 = vmatprep.subr.bf16.mxu0 0
    %302 = vmatpush1.bf16.msra.mxu0 %v283
    %303 = vmatprep.subr.bf16.mxu0 0
    %304 = vmatpush1.bf16.msra.mxu0 %v284
    %305 = vmatprep.subr.bf16.mxu0 0
    %306 = vmatpush1.bf16.msra.mxu0 %v285
    %307 = vmatprep.subr.bf16.mxu0 0
    %308 = vmatpush1.bf16.msra.mxu0 %v286
    %309 = vmatprep.subr.bf16.mxu0 0
    %310 = vmatpush1.bf16.msra.mxu0 %v287
    %311 = vmatprep.subr.bf16.mxu0 0
    %312 = vmatpush1.bf16.msra.mxu0 %v288
    %313 = vmatprep.subr.bf16.mxu0 0
    %314 = vmatpush1.bf16.msra.mxu0 0
    %315 = vmatprep.subr.bf16.mxu0 0
    %316 = vmatpush1.bf16.msra.mxu0 0
    %317 = vmatprep.subr.bf16.mxu0 0
    %318 = vmatpush1.bf16.msra.mxu0 0
    %319 = vmatprep.subr.bf16.mxu0 0
    %320 = vmatpush1.bf16.msra.mxu0 0
    %321 = vmatprep.subr.bf16.mxu0 0
    %322 = vmatpush1.bf16.msra.mxu0 0
    %323 = vmatprep.subr.bf16.mxu0 0
    %324 = vmatpush1.bf16.msra.mxu0 0
    %325 = vmatprep.subr.bf16.mxu0 0
    %326 = vmatpush1.bf16.msra.mxu0 0
    %327 = vmatprep.subr.bf16.mxu0 0
    %328 = vmatpush1.bf16.msra.mxu0 0
    %329 = vmatprep.mubr.bf16.mxu0 0
    %330 = vmatmul.mubr.bf16.gmra.mrb[0].mxu0 %v225
    %v331 = vpop.f32.mrb[0].mxu0
    %v332 = vadd.f32 %v247, %v331
    %v333 = vpop.f32.mrb[0].mxu0
    %v334 = vpop.f32.mrb[0].mxu0
    %v335 = vadd.f32 %v247, %v334
    %v336 = vpop.f32.mrb[0].mxu0
    %337 = vdwg.mxu0
    %vm338 = vcmask 64512
    %339 = vst.msk [vmem:[%s7] sm:$0xff] %vm338, %v332
    %340 = vst.msk [vmem:[%s7 + $0x8] sm:$0xff] %vm338, %v335
    // Predicated region
    $region34: #{tpu_custom_call.1} parent=1 // pred_check
      _
    $region35: #{tpu_custom_call.1} parent=1 // pred_check_branch
      %342 = sbr.rel (0) target = $region37
    $region36: #{tpu_custom_call.1} parent=1 // pred_region
      _
    $region37: #{tpu_custom_call.1} parent=1 // pred_fallthru
      _
    // Predicated region
    $region38: #{tpu_custom_call.1} parent=1 // pred_check
      _
    $region39: #{tpu_custom_call.1} parent=1 // pred_check_branch
      %344 = sbr.rel (0) target = $region41
    $region40: #{tpu_custom_call.1} parent=1 // pred_region
      _
    $region41: #{tpu_custom_call.1} parent=1 // pred_fallthru
      _
    %345 = vsyncpa [#allocation3], 1

</llo_original>
